<compile_context>
chip_gen: v6e
topology: v6e:2x2x1
jax: 0.10.0
libtpu: 0.0.40
codegen_flags: <defaults>
</compile_context>

<pallas_src>
import math

import jax
import jax.numpy as jnp
from jax.experimental import pallas as pl
from jax.experimental.pallas import tpu as pltpu


def _add_pe_kernel(x_ref, pe_ref, o_ref):
    # Pure memory-bound elementwise add on a lane-dense (TS, B*D) tile.
    # Accumulate in f32, cast on store.
    o_ref[...] = (x_ref[...].astype(jnp.float32) + pe_ref[...]).astype(o_ref.dtype)


def make_positional_encoding(d_model: int, max_len: int = 5000) -> jnp.ndarray:
    """Build the `pe` buffer exactly like the torch __init__ (always float32).

    Returns shape (max_len, 1, d_model), matching torch's
    pe.unsqueeze(0).transpose(0, 1).  Works for odd d_model too.
    """
    position = jnp.arange(max_len, dtype=jnp.float32)[:, None]               # (max_len, 1)
    div_term = jnp.exp(jnp.arange(0, d_model, 2, dtype=jnp.float32)
                       * (-math.log(10000.0) / d_model))                     # (ceil(D/2),)
    angles = position * div_term                                             # (max_len, ceil(D/2))
    pe = jnp.zeros((max_len, d_model), dtype=jnp.float32)
    pe = pe.at[:, 0::2].set(jnp.sin(angles))
    pe = pe.at[:, 1::2].set(jnp.cos(angles[:, : d_model // 2]))              # odd-D safe
    return pe[:, None, :]                                                    # (max_len, 1, D)


def _choose_tile_rows(seq_len: int, row_elems: int, itemsize: int,
                      block_budget_bytes: int = 4 << 20) -> int:
    """Largest S-tile (multiple of 8) whose per-array block fits the budget.

    Budget of ~4 MiB per block keeps (x + pe + out) * 2 double-buffers well
    under the 32 MiB scoped-VMEM limit we request, which is safe on
    v5e (128 MiB phys), v6e (128 MiB) and v7x (64 MiB).
    """
    row_bytes = max(1, row_elems * itemsize)
    max_rows = max(1, block_budget_bytes // row_bytes)
    if max_rows >= seq_len:
        return seq_len                       # whole array in a single block
    ts = max(8, (max_rows // 8) * 8)         # keep sublane dim a multiple of 8
    return min(ts, seq_len)


def positional_encoding_forward(x: jnp.ndarray, pe: jnp.ndarray,
                                max_len: int | None = None) -> jnp.ndarray:
    """x: (S, B, D); pe: (max_len, 1, D) float32 buffer.  Returns x + pe[:S]."""
    S, B, D = x.shape
    if max_len is None:
        max_len = pe.shape[0]
    assert S <= max_len, "Too long sequence: increase 'max_len'"

    # Lane-dense layout: flatten (B, D) into the last axis.  pe is broadcast
    # over batch in the wrapper (cheap XLA tile) so the kernel body stays a
    # plain aligned add with no in-kernel relayout ops.
    x2d = x.reshape(S, B * D)
    pe2d = pe[:S, 0, :].astype(jnp.float32)          # (S, D)
    pe_wide = jnp.tile(pe2d, (1, B))                 # (S, B*D)

    itemsize = max(jnp.dtype(x.dtype).itemsize, 4)   # pe block is f32
    ts = _choose_tile_rows(S, B * D, itemsize)
    grid = (pl.cdiv(S, ts),)

    out2d = pl.pallas_call(
        _add_pe_kernel,
        out_shape=jax.ShapeDtypeStruct((S, B * D), x.dtype),
        grid=grid,
        in_specs=[
            pl.BlockSpec((ts, B * D), lambda i: (i, 0)),   # x tile
            pl.BlockSpec((ts, B * D), lambda i: (i, 0)),   # pe tile (f32)
        ],
        out_specs=pl.BlockSpec((ts, B * D), lambda i: (i, 0)),
        compiler_params=pltpu.CompilerParams(
            dimension_semantics=("parallel",),             # megacore on v7x
            vmem_limit_bytes=32 * 1024 * 1024,
        ),
    )(x2d, pe_wide)

    return out2d.reshape(S, B, D)


if __name__ == "__main__":
    d_model = 32
    max_len = 64
    seq = 8
    batch = 2

    key = jax.random.PRNGKey(0)
    x = jax.random.normal(key, (seq, batch, d_model), dtype=jnp.float32)

    pe = make_positional_encoding(d_model, max_len=max_len)

    out = positional_encoding_forward(x, pe)
    out = jax.block_until_ready(out)

    # Reference: same math as the PyTorch forward (broadcast add over batch).
    ref = x + pe[:seq]
    assert out.shape == (seq, batch, d_model)
    assert jnp.allclose(out, ref, atol=1e-6, rtol=1e-6), "mismatch vs reference"

    print("KERNEL_OK")
</pallas_src>

<mosaic_0001>
module attributes {stable_mosaic.version = 11 : i64} {
  func.func @_add_pe_kernel(%arg0: i32, %arg1: memref<8x64xf32, #tpu.memory_space<vmem>>, %arg2: memref<8x64xf32, #tpu.memory_space<vmem>>, %arg3: memref<8x64xf32, #tpu.memory_space<vmem>>) attributes {dimension_semantics = [#tpu.dimension_semantics<parallel>], iteration_bounds = array<i64: 1>, scalar_prefetch = 0 : i64, scratch_operands = 0 : i64, tpu.core_type = #tpu.core_type<tc>, window_params = [{transform_indices = @transform_0, window_bounds = array<i64: 8, 64>}, {transform_indices = @transform_1, window_bounds = array<i64: 8, 64>}, {transform_indices = @transform_2, window_bounds = array<i64: 8, 64>}]} {
    %c0 = arith.constant 0 : index
    %c0_0 = arith.constant 0 : index
    %0 = vector.load %arg1[%c0, %c0_0] : memref<8x64xf32, #tpu.memory_space<vmem>>, vector<8x64xf32>
    %c0_1 = arith.constant 0 : index
    %c0_2 = arith.constant 0 : index
    %1 = vector.load %arg2[%c0_1, %c0_2] : memref<8x64xf32, #tpu.memory_space<vmem>>, vector<8x64xf32>
    %2 = arith.addf %0, %1 : vector<8x64xf32>
    %c0_3 = arith.constant 0 : index
    %c0_4 = arith.constant 0 : index
    %3 = vector.load %arg3[%c0_3, %c0_4] : memref<8x64xf32, #tpu.memory_space<vmem>>, vector<8x64xf32>
    tpu.vector_store %arg3[%c0_3, %c0_4], %2 {strides = array<i32>} : memref<8x64xf32, #tpu.memory_space<vmem>>, vector<8x64xf32>,
    return
  }
  func.func @transform_0(%arg0: i32) -> (i32, i32) {
    %c0_i32 = arith.constant 0 : i32
    %c0_i32_0 = arith.constant 0 : i32
    return %arg0, %c0_i32 : i32, i32
  }
  func.func @transform_1(%arg0: i32) -> (i32, i32) {
    %c0_i32 = arith.constant 0 : i32
    %c0_i32_0 = arith.constant 0 : i32
    return %arg0, %c0_i32 : i32, i32
  }
  func.func @transform_2(%arg0: i32) -> (i32, i32) {
    %c0_i32 = arith.constant 0 : i32
    %c0_i32_0 = arith.constant 0 : i32
    return %arg0, %c0_i32 : i32, i32
  }
}

</mosaic_0001>

<llo_original>
// kernel: tpu_custom_call.1
$region0: #{tpu_custom_call.1}
  #allocation0 [shape = 'u32[]', space=smem, size = 0x4, offset = 0x4, fixed_abs, tag = 'smem constant byte address 0x4 - core index']
  #allocation1 [shape = 'u32[144,128]{1,0:T(1,128)}', space=vmem, size = 0x12000, scoped, tag = 'internal scratch']
  %s0 = inlined_call_operand.hbm [shape: f32[8,64], index: 0, kind: input, shape index: {}]
  %s1 = inlined_call_operand.hbm [shape: f32[8,64], index: 1, kind: input, shape index: {}]
  %s2 = inlined_call_operand.hbm [shape: f32[8,64], index: 2, kind: output, shape index: {}]
  %s3 = sld [smem:[#allocation0]]
  $region26: #{tpu_custom_call.1} parent=0
    _
  %s5 = ssub.s32 1, %s3
  %s6 = scalar_select 0, %s5, %s3
  $region1: #{tpu_custom_call.1} parent=0
    #allocation2 [shape = 'u8[4096]{0}', space=vmem, size = 0x1000, scoped, tag = 'input window, operand 0, single buffered']
    #allocation3 [shape = 's32[1]{0}', space=sflag, size = 0x4, scoped, tag = 'scoped memory for tpu_custom_call.1']
    #allocation4 [shape = 's32[1]{0}', space=sflag, size = 0x4, scoped, tag = 'scoped memory for tpu_custom_call.1']
    #allocation5 [shape = 'u8[4096]{0}', space=vmem, size = 0x1000, scoped, tag = 'input window, operand 1, single buffered']
    #allocation6 [shape = 's32[1]{0}', space=sflag, size = 0x4, scoped, tag = 'scoped memory for tpu_custom_call.1']
    #allocation7 [shape = 'u8[4096]{0}', space=vmem, size = 0x1000, scoped, tag = 'output window, operand 0, single buffered']
    %7 = vsyncpa [#allocation3], 0
    %8 = vsyncpa [#allocation6], 0
    %9 = vsyncpa [#allocation4], 0
    // Predicated region
    $region2: #{tpu_custom_call.1} parent=1 // pred_check
      _
    $region3: #{tpu_custom_call.1} parent=1 // pred_check_branch
      %11 = sbr.rel (0) target = $region5
    $region4: #{tpu_custom_call.1} parent=1 // pred_region
      %s13 = ssub.s32 128, 128
      %14 = vsyncadd [#allocation3], %s13
      %s16 = sshll.u32 [#allocation2], 4
      %s17 = int_to_ptr.vmem [resolvable:$true] %s16
      %19 = dma.hbm_to_vmem [thread:$0]  %s0, 128, %s17, [#allocation3]
    $region5: #{tpu_custom_call.1} parent=1 // pred_fallthru
      _
    // Predicated region
    $region6: #{tpu_custom_call.1} parent=1 // pred_check
      _
    $region7: #{tpu_custom_call.1} parent=1 // pred_check_branch
      %21 = sbr.rel (0) target = $region9
    $region8: #{tpu_custom_call.1} parent=1 // pred_region
      %s23 = ssub.s32 128, 128
      %24 = vsyncadd [#allocation6], %s23
      %s26 = sshll.u32 [#allocation5], 4
      %s27 = int_to_ptr.vmem [resolvable:$true] %s26
      %29 = dma.hbm_to_vmem [thread:$0]  %s1, 128, %s27, [#allocation6]
    $region9: #{tpu_custom_call.1} parent=1 // pred_fallthru
      _
    // Predicated region
    $region10: #{tpu_custom_call.1} parent=1 // pred_check
      _
    $region11: #{tpu_custom_call.1} parent=1 // pred_check_branch
      %31 = sbr.rel (0) target = $region13
    $region12: #{tpu_custom_call.1} parent=1 // pred_region
      %32 = dma.done [#allocation3], 128
    $region13: #{tpu_custom_call.1} parent=1 // pred_fallthru
      _
    // Predicated region
    $region14: #{tpu_custom_call.1} parent=1 // pred_check
      _
    $region15: #{tpu_custom_call.1} parent=1 // pred_check_branch
      %34 = sbr.rel (0) target = $region17
    $region16: #{tpu_custom_call.1} parent=1 // pred_region
      %35 = dma.done [#allocation6], 128
    $region17: #{tpu_custom_call.1} parent=1 // pred_fallthru
      _
    %v36 = vld [vmem:[#allocation2] sm:$0xff]
    %v37 = vld [vmem:[#allocation5] sm:$0xff]
    %v38 = vadd.f32 %v36, %v37
    %vm39 = vcmask 523264
    %40 = vst.msk [vmem:[#allocation7] sm:$0xff] %vm39, %v38
    // Predicated region
    $region18: #{tpu_custom_call.1} parent=1 // pred_check
      _
    $region19: #{tpu_custom_call.1} parent=1 // pred_check_branch
      %42 = sbr.rel (0) target = $region21
    $region20: #{tpu_custom_call.1} parent=1 // pred_region
      %s44 = ssub.s32 128, 128
      %45 = vsyncadd [#allocation4], %s44
      %s47 = sshll.u32 [#allocation7], 4
      %s48 = int_to_ptr.vmem [resolvable:$true] %s47
      %50 = dma.vmem_to_hbm [thread:$0]  %s48, 128, %s2, [#allocation4]
    $region21: #{tpu_custom_call.1} parent=1 // pred_fallthru
      _
    // Predicated region
    $region22: #{tpu_custom_call.1} parent=1 // pred_check
      _
    $region23: #{tpu_custom_call.1} parent=1 // pred_check_branch
      %52 = sbr.rel (0) target = $region25
    $region24: #{tpu_custom_call.1} parent=1 // pred_region
      %53 = dma.done [#allocation4], 128
    $region25: #{tpu_custom_call.1} parent=1 // pred_fallthru
      _
    %54 = vsyncpa [#allocation3], 1
    %55 = vsyncpa [#allocation6], 1
    %56 = vsyncpa [#allocation4], 1

</llo_original>
